<compile_context>
chip_gen: v7x
topology: tpu7x:2x2x1
jax: 0.10.0
libtpu: 0.0.40
codegen_flags: <defaults>
</compile_context>

<pallas_src>
import functools
import math

import jax
import jax.numpy as jnp
from jax.experimental import pallas as pl
from jax.experimental.pallas import tpu as pltpu


def _tcln_kernel(x_ref, ab_ref, o_ref, *, eps):
    """One (C, TM) tile: channels on sublanes, pixels on lanes."""
    x = x_ref[0].astype(jnp.float32)              # (C, TM)
    ab = ab_ref[0]                                # (C, 2)  pre-folded per-sample params
    a = ab[:, 0:1]                                # (C, 1) = gamma * ln_weight
    b = ab[:, 1:2]                                # (C, 1) = gamma * ln_bias + beta

    # channels_first LayerNorm: stats over the channel (sublane) axis per pixel.
    mu = jnp.mean(x, axis=0, keepdims=True)       # (1, TM)  XLU sublane reduce
    xc = x - mu
    var = jnp.mean(xc * xc, axis=0, keepdims=True)  # biased, matches torch
    inv = jax.lax.rsqrt(var + eps)                # EUP rsqrt, not a VALU divide

    o_ref[0] = (xc * inv * a + b).astype(o_ref.dtype)


def _pick_tm(S, C, itemsize, N, tm):
    """Lane-tile width: full S if small, else a multiple of 128 sized so the
    double-buffered in+out pipeline stays ~<=16 MiB (works on v5e/v6e/v7x)."""
    if tm is None:
        budget = 16 * 1024 * 1024
        per_lane = 4 * C * itemsize               # 2 in-bufs + 2 out-bufs per lane
        tm = max(128, min(4096, (budget // per_lane) // 128 * 128))
    if S <= tm:
        tm = S                                    # full-extent block (any width ok)
    else:
        tm = max(128, (tm // 128) * 128)
    # v7x megacore: expose >=2 independent grid steps when there is one sample.
    if N == 1 and tm == S and S > 256:
        tm = max(128, (S // 2 // 128) * 128)
    return tm


def time_conditioned_layernorm(x, t, wg, bg, wb, bb, lnw, lnb, *, eps=1e-6, tm=None):
    """x: (N, C, *spatial); t: (N, C); wg/wb: (C, C, 1) or (C, C); bg/bb/lnw/lnb: (C,)."""
    N, C = x.shape[:2]
    spatial = x.shape[2:]
    S = math.prod(spatial) if spatial else 1

    xs = x.reshape(N, C, S)                       # free merge; keep native dtype

    # Hoist the k=1 Conv1d and fold it with the LN affine (tiny O(N*C^2) work).
    f32 = jnp.float32
    t32 = t.astype(f32)
    gamma = t32 @ wg.reshape(C, C).astype(f32).T + bg.astype(f32).reshape(1, C)
    beta = t32 @ wb.reshape(C, C).astype(f32).T + bb.astype(f32).reshape(1, C)
    a = gamma * lnw.astype(f32).reshape(1, C)
    b = gamma * lnb.astype(f32).reshape(1, C) + beta
    ab = jnp.stack([a, b], axis=-1)               # (N, C, 2) packed per-sample params

    itemsize = jnp.dtype(x.dtype).itemsize
    tm_sel = _pick_tm(S, C, itemsize, N, tm)
    n_s = pl.cdiv(S, tm_sel)

    block_bytes = C * tm_sel * itemsize
    vmem_limit = int(min(max(8 * block_bytes + (8 << 20), 32 << 20), 48 << 20))

    out = pl.pallas_call(
        functools.partial(_tcln_kernel, eps=eps),
        out_shape=jax.ShapeDtypeStruct((N, C, S), x.dtype),
        grid=(N, n_s),
        in_specs=[
            pl.BlockSpec((1, C, tm_sel), lambda n, s: (n, 0, s)),   # x tile
            pl.BlockSpec((1, C, 2), lambda n, s: (n, 0, 0)),        # packed a/b
        ],
        out_specs=pl.BlockSpec((1, C, tm_sel), lambda n, s: (n, 0, s)),
        compiler_params=pltpu.CompilerParams(
            dimension_semantics=("parallel", "parallel"),
            vmem_limit_bytes=vmem_limit),
    )(xs, ab)

    return out.reshape((N, C) + spatial)


def ref_forward(x, t, wg, bg, wb, bb, lnw, lnb, eps=1e-6):
    """Pure-JAX reference matching the PyTorch module semantics."""
    N, C = x.shape[:2]
    sr = x.ndim - 2
    xf = x.astype(jnp.float32)
    gamma = jnp.einsum('oi,ni->no', wg.reshape(C, C), t) + bg
    beta = jnp.einsum('oi,ni->no', wb.reshape(C, C), t) + bb
    mu = xf.mean(axis=1, keepdims=True)
    var = ((xf - mu) ** 2).mean(axis=1, keepdims=True)
    xn = (xf - mu) / jnp.sqrt(var + eps)
    pshape = (1, C) + (1,) * sr
    xn = xn * lnw.reshape(pshape) + lnb.reshape(pshape)
    bshape = (N, C) + (1,) * sr
    return gamma.reshape(bshape) * xn + beta.reshape(bshape)


def _make_inputs(key, N, C, spatial, dtype=jnp.float32):
    k = jax.random.split(key, 8)
    x = jax.random.normal(k[0], (N, C) + spatial, jnp.float32).astype(dtype)
    t = jax.random.normal(k[1], (N, C), jnp.float32)
    wg = 0.1 * jax.random.normal(k[2], (C, C, 1), jnp.float32)   # Conv1d weight
    bg = 1.0 + 0.1 * jax.random.normal(k[3], (C,), jnp.float32)
    wb = 0.1 * jax.random.normal(k[4], (C, C, 1), jnp.float32)
    bb = 0.1 * jax.random.normal(k[5], (C,), jnp.float32)
    lnw = 1.0 + 0.1 * jax.random.normal(k[6], (C,), jnp.float32)
    lnb = 0.1 * jax.random.normal(k[7], (C,), jnp.float32)
    return x, t, wg, bg, wb, bb, lnw, lnb


if __name__ == "__main__":
    # 1) Main case: 2D UNET feature map, f32, S a clean multiple of 128.
    args = _make_inputs(jax.random.PRNGKey(0), 2, 128, (16, 16))
    out = jax.block_until_ready(time_conditioned_layernorm(*args))
    ref = ref_forward(*args)
    assert out.shape == args[0].shape, out.shape
    err = float(jnp.max(jnp.abs(out - ref)))
    assert jnp.allclose(out, ref, atol=1e-4, rtol=1e-4), err

    # 2) Ragged spatial extent (S % tm != 0) -> exercises masked edge stores
    #    without any wrapper-side jnp.pad / slice.
    args2 = _make_inputs(jax.random.PRNGKey(1), 1, 32, (300,))
    out2 = jax.block_until_ready(time_conditioned_layernorm(*args2, tm=128))
    ref2 = ref_forward(*args2)
    err2 = float(jnp.max(jnp.abs(out2 - ref2)))
    assert jnp.allclose(out2, ref2, atol=1e-4, rtol=1e-4), err2

    # 3) bf16 I/O: native dtype through the pipeline, f32 stats inside.
    args3 = _make_inputs(jax.random.PRNGKey(2), 2, 64, (8, 8), dtype=jnp.bfloat16)
    out3 = jax.block_until_ready(time_conditioned_layernorm(*args3))
    assert out3.dtype == jnp.bfloat16
    ref3 = ref_forward(*args3)
    err3 = float(jnp.max(jnp.abs(out3.astype(jnp.float32) - ref3)))
    assert jnp.allclose(out3.astype(jnp.float32), ref3, atol=5e-2, rtol=5e-2), err3

    print("KERNEL_OK")
</pallas_src>

<mosaic_0001>
module attributes {stable_mosaic.version = 11 : i64} {
  func.func @_tcln_kernel(%arg0: i32, %arg1: i32, %arg2: memref<1x128x256xf32, #tpu.memory_space<vmem>>, %arg3: memref<1x128x2xf32, #tpu.memory_space<vmem>>, %arg4: memref<1x128x256xf32, #tpu.memory_space<vmem>>) attributes {dimension_semantics = [#tpu.dimension_semantics<parallel>, #tpu.dimension_semantics<parallel>], iteration_bounds = array<i64: 2, 1>, scalar_prefetch = 0 : i64, scratch_operands = 0 : i64, tpu.core_type = #tpu.core_type<tc>, window_params = [{transform_indices = @transform_0, window_bounds = array<i64: 1, 128, 256>}, {transform_indices = @transform_1, window_bounds = array<i64: 1, 128, 2>}, {transform_indices = @transform_2, window_bounds = array<i64: 1, 128, 256>}]} {
    %c0 = arith.constant 0 : index
    %c0_0 = arith.constant 0 : index
    %c0_1 = arith.constant 0 : index
    %0 = vector.load %arg2[%c0, %c0_0, %c0_1] : memref<1x128x256xf32, #tpu.memory_space<vmem>>, vector<1x128x256xf32>
    %1 = vector.shape_cast %0 : vector<1x128x256xf32> to vector<128x256xf32>
    %c0_2 = arith.constant 0 : index
    %c0_3 = arith.constant 0 : index
    %c0_4 = arith.constant 0 : index
    %2 = vector.load %arg3[%c0_2, %c0_3, %c0_4] : memref<1x128x2xf32, #tpu.memory_space<vmem>>, vector<1x128x2xf32>
    %3 = vector.shape_cast %2 : vector<1x128x2xf32> to vector<128x2xf32>
    %4 = vector.extract_strided_slice %3 {offsets = [0, 0], sizes = [128, 1], strides = [1, 1]} : vector<128x2xf32> to vector<128x1xf32>
    %5 = vector.extract_strided_slice %3 {offsets = [0, 1], sizes = [128, 1], strides = [1, 1]} : vector<128x2xf32> to vector<128x1xf32>
    %cst = arith.constant dense<0.000000e+00> : vector<256xf32>
    %6 = vector.multi_reduction <add>, %1, %cst [0] : vector<128x256xf32> to vector<256xf32>
    %7 = vector.shape_cast %6 : vector<256xf32> to vector<1x256xf32>
    %cst_5 = arith.constant 1.280000e+02 : f32
    %8 = vector.broadcast %cst_5 : f32 to vector<1x256xf32>
    %9 = arith.divf %7, %8 : vector<1x256xf32>
    %10 = vector.broadcast %9 : vector<1x256xf32> to vector<128x256xf32>
    %11 = arith.subf %1, %10 : vector<128x256xf32>
    %12 = arith.mulf %11, %11 : vector<128x256xf32>
    %cst_6 = arith.constant dense<0.000000e+00> : vector<256xf32>
    %13 = vector.multi_reduction <add>, %12, %cst_6 [0] : vector<128x256xf32> to vector<256xf32>
    %14 = vector.shape_cast %13 : vector<256xf32> to vector<1x256xf32>
    %cst_7 = arith.constant 1.280000e+02 : f32
    %15 = vector.broadcast %cst_7 : f32 to vector<1x256xf32>
    %16 = arith.divf %14, %15 : vector<1x256xf32>
    %cst_8 = arith.constant 9.99999997E-7 : f32
    %17 = vector.broadcast %cst_8 : f32 to vector<1x256xf32>
    %18 = arith.addf %16, %17 : vector<1x256xf32>
    %19 = math.rsqrt %18 : vector<1x256xf32>
    %20 = vector.broadcast %19 : vector<1x256xf32> to vector<128x256xf32>
    %21 = arith.mulf %11, %20 : vector<128x256xf32>
    %22 = vector.broadcast %4 : vector<128x1xf32> to vector<128x256xf32>
    %23 = arith.mulf %21, %22 : vector<128x256xf32>
    %24 = vector.broadcast %5 : vector<128x1xf32> to vector<128x256xf32>
    %25 = arith.addf %23, %24 : vector<128x256xf32>
    %c0_9 = arith.constant 0 : index
    %c0_10 = arith.constant 0 : index
    %c0_11 = arith.constant 0 : index
    %26 = vector.load %arg4[%c0_9, %c0_10, %c0_11] : memref<1x128x256xf32, #tpu.memory_space<vmem>>, vector<1x128x256xf32>
    %27 = vector.shape_cast %26 : vector<1x128x256xf32> to vector<128x256xf32>
    %28 = vector.shape_cast %25 : vector<128x256xf32> to vector<1x128x256xf32>
    tpu.vector_store %arg4[%c0_9, %c0_10, %c0_11], %28 {strides = array<i32>} : memref<1x128x256xf32, #tpu.memory_space<vmem>>, vector<1x128x256xf32>,
    return
  }
  func.func @transform_0(%arg0: i32, %arg1: i32) -> (i32, i32, i32) {
    %c0_i32 = arith.constant 0 : i32
    %c0_i32_0 = arith.constant 0 : i32
    return %arg0, %c0_i32, %arg1 : i32, i32, i32
  }
  func.func @transform_1(%arg0: i32, %arg1: i32) -> (i32, i32, i32) {
    %c0_i32 = arith.constant 0 : i32
    %c0_i32_0 = arith.constant 0 : i32
    %c0_i32_1 = arith.constant 0 : i32
    return %arg0, %c0_i32, %c0_i32_0 : i32, i32, i32
  }
  func.func @transform_2(%arg0: i32, %arg1: i32) -> (i32, i32, i32) {
    %c0_i32 = arith.constant 0 : i32
    %c0_i32_0 = arith.constant 0 : i32
    return %arg0, %c0_i32, %arg1 : i32, i32, i32
  }
}

</mosaic_0001>

<llo_original>
// kernel: tpu_custom_call.1
$region0: #{tpu_custom_call.1}
  #allocation0 [shape = 'u32[]', space=smem, size = 0x4, offset = 0x4, fixed_abs, tag = 'smem constant byte address 0x4 - core index']
  #allocation1 [shape = 'u32[144,128]{1,0:T(1,128)}', space=vmem, size = 0x12000, scoped, tag = 'internal scratch']
  %s0 = inlined_call_operand.hbm [shape: f32[2,128,256], index: 0, kind: input, shape index: {}]
  %s1 = inlined_call_operand.vmem [shape: f32[2,128,2], index: 1, kind: input, shape index: {}]
  %s2 = inlined_call_operand.hbm [shape: f32[2,128,256], index: 2, kind: output, shape index: {}]
  %s3 = sld [smem:[#allocation0]]
  $region45: #{tpu_custom_call.1} parent=0
    _
  %s5 = ssub.s32 1, %s3
  %s6 = scalar_select 0, %s5, %s3
  $region1: #{tpu_custom_call.1} parent=0
    #allocation2 [shape = 'u8[262144]{0}', space=vmem, size = 0x40000, scoped, tag = 'input window, operand 0']
    #allocation3 [shape = 's32[2]{0}', space=sflag, size = 0x8, scoped, tag = 'scoped memory for tpu_custom_call.1']
    #allocation4 [shape = 's32[2]{0}', space=sflag, size = 0x8, scoped, tag = 'scoped memory for tpu_custom_call.1']
    #allocation5 [shape = 'u8[262144]{0}', space=vmem, size = 0x40000, scoped, tag = 'output window, operand 0']
    %7 = vsyncpa [#allocation3], 0
    %s8 = scalar_lea.sflag [#allocation3], 1
    %9 = vsyncpa %s8, 0
    %10 = vsyncpa [#allocation4], 0
    %s11 = scalar_lea.sflag [#allocation4], 1
    %12 = vsyncpa %s11, 0
    loop: start=0, step=1, limit=4
    $region2: #{tpu_custom_call.1} parent=1 // loop_pre_header
      _
    $region3: #{tpu_custom_call.1} parent=1 // loop_header
      %s14 = sphi 0, %s18
      %p15 = scmp.ge.s32.totalorder %s14, 4
      %s21 = sphi 0, %s33
      %s22 = sphi 0, %s29
      %s23 = sphi 0, %s21
      %s24 = sphi 0, %s22
      %s25 = sphi 0, %s23
      %s26 = sphi 0, %s24
      %s38 = sphi 0, %s40
      %s41 = sphi 0, %s38
      %s42 = sphi 0, %s41
      %s58 = sphi 0, %s42
      %s64 = sphi 0, %s66
      %s67 = sphi 0, %s64
      %s68 = sphi 0, %s67
      %s84 = sphi 0, %s68
      %s92 = sphi 0, %s94
      %s95 = sphi 0, %s92
      %s96 = sphi 0, %s95
      %s112 = sphi 0, %s96
    $region4: #{tpu_custom_call.1} parent=1 // loop_header_branch
      %17 = sbr.rel (%p15) target = $region8
    $region5: #{tpu_custom_call.1} parent=1 // loop_body
      %s19 = ssub.s32 %s14, 1
      %s20 = ssub.s32 %s14, 2
      %s27 = sadd.s32 1, %s22
      %p28 = scmp.ge.s32.totalorder %s27, 1
      %s29 = scalar_select %p28, 0, %s27
      %s30 = sadd.s32 1, %s21
      %s31 = scalar_select %p28, %s30, %s21
      %p32 = scmp.ge.s32.totalorder %s31, 2
      %s33 = scalar_select %p32, 0, %s31
      %s34 = ssub.s32 %s21, %s33
      %s35 = ssub.s32 %s22, %s29
      %s36 = sor.u32 %s34, %s35
      %p37 = scmp.eq.s32.totalorder %s36, 0
      %s39 = sadd.s32 %s38, 1
      %s40 = scalar_select %p37, %s38, %s39
      %p43 = pneg %p37
      %p44 = scmp.eq.s32.totalorder %s14, 1
      %p45 = por %p43, %p44
      %p46 = scmp.ne.s32.totalorder %s38, %s41
      %p47 = scmp.eq.s32.totalorder %s14, 0
      %p48 = por %p46, %p47
      %p49 = scmp.ne.s32.totalorder %s38, %s41
      %p50 = scmp.eq.s32.totalorder %s19, 1
      %p51 = por %p49, %p50
      %p52 = scmp.ne.s32.totalorder %s41, %s42
      %p53 = scmp.eq.s32.totalorder %s19, 0
      %p54 = por %p52, %p53
      %p55 = scmp.ne.s32.totalorder %s41, %s42
      %p56 = scmp.eq.s32.totalorder %s20, 1
      %p57 = por %p55, %p56
      %p59 = scmp.ne.s32.totalorder %s42, %s58
      %p60 = scmp.eq.s32.totalorder %s20, 0
      %p61 = por %p59, %p60
      %s62 = ssub.s32 %s21, %s33
      %p63 = scmp.eq.s32.totalorder %s62, 0
      %s65 = sadd.s32 %s64, 1
      %s66 = scalar_select %p63, %s64, %s65
      %p69 = pneg %p63
      %p70 = scmp.eq.s32.totalorder %s14, 1
      %p71 = por %p69, %p70
      %p72 = scmp.ne.s32.totalorder %s64, %s67
      %p73 = scmp.eq.s32.totalorder %s14, 0
      %p74 = por %p72, %p73
      %p75 = scmp.ne.s32.totalorder %s64, %s67
      %p76 = scmp.eq.s32.totalorder %s19, 1
      %p77 = por %p75, %p76
      %p78 = scmp.ne.s32.totalorder %s67, %s68
      %p79 = scmp.eq.s32.totalorder %s19, 0
      %p80 = por %p78, %p79
      %p81 = scmp.ne.s32.totalorder %s67, %s68
      %p82 = scmp.eq.s32.totalorder %s20, 1
      %p83 = por %p81, %p82
      %p85 = scmp.ne.s32.totalorder %s68, %s84
      %p86 = scmp.eq.s32.totalorder %s20, 0
      %p87 = por %p85, %p86
      %s88 = ssub.s32 %s21, %s33
      %s89 = ssub.s32 %s22, %s29
      %s90 = sor.u32 %s88, %s89
      %p91 = scmp.eq.s32.totalorder %s90, 0
      %s93 = sadd.s32 %s92, 1
      %s94 = scalar_select %p91, %s92, %s93
      %p97 = pneg %p91
      %p98 = scmp.eq.s32.totalorder %s14, 1
      %p99 = por %p97, %p98
      %p100 = scmp.ne.s32.totalorder %s92, %s95
      %p101 = scmp.eq.s32.totalorder %s14, 0
      %p102 = por %p100, %p101
      %p103 = scmp.ne.s32.totalorder %s92, %s95
      %p104 = scmp.eq.s32.totalorder %s19, 1
      %p105 = por %p103, %p104
      %p106 = scmp.ne.s32.totalorder %s95, %s96
      %p107 = scmp.eq.s32.totalorder %s19, 0
      %p108 = por %p106, %p107
      %p109 = scmp.ne.s32.totalorder %s95, %s96
      %p110 = scmp.eq.s32.totalorder %s20, 1
      %p111 = por %p109, %p110
      %p113 = scmp.ne.s32.totalorder %s96, %s112
      %p114 = scmp.eq.s32.totalorder %s20, 0
      %p115 = por %p113, %p114
      %p116 = scmp.le.s32.totalorder 1, %s14
      %p117 = scmp.lt.s32.totalorder %s14, 3
      %p118 = pnand %p116, %p117
      %p119 = pneg %p118
      // Predicated region
      $region9: #{tpu_custom_call.1} parent=5 // pred_check
        _
      $region10: #{tpu_custom_call.1} parent=5 // pred_check_branch
        %121 = sbr.rel (%p118) target = $region12
      $region11: #{tpu_custom_call.1} parent=5 // pred_region
        %s122 = ssub.s32 %s14, 1
      $region12: #{tpu_custom_call.1} parent=5 // pred_fallthru
        _
      %p123 = scmp.lt.s32.totalorder %s14, 2
      // Predicated region
      $region13: #{tpu_custom_call.1} parent=5 // pred_check
        %p124 = pneg %p123
      $region14: #{tpu_custom_call.1} parent=5 // pred_check_branch
        %126 = sbr.rel (%p124) target = $region16
      $region15: #{tpu_custom_call.1} parent=5 // pred_region
        // Predicated region
        $region17: #{tpu_custom_call.1} parent=15 // pred_check
          %p127 = pneg %p48
        $region18: #{tpu_custom_call.1} parent=15 // pred_check_branch
          %129 = sbr.rel (%p127) target = $region20
        $region19: #{tpu_custom_call.1} parent=15 // pred_region
          %s130 = sand.u32 %s38, 1
          %s131 = scalar_lea.sflag [#allocation3], %s130
          %s132 = sand.u32 %s38, 1
          %s133 = smul.addr %s132, 256
          %s134 = scalar_lea.vmem [#allocation2], %s133
          %s135 = smul.u32 2, %s22
          %s137 = ssub.s32 4096, 4096
          %138 = vsyncadd %s131, %s137
          %s139 = smul.addr %s21, 32
          %s140 = sadd.s32 %s135, %s139
          %s141 = smul.addr %s140, 128
          %s142 = scalar_lea.hbm %s0, %s141
          %s143 = sshll.u32 %s134, 4
          %s144 = int_to_ptr.vmem [resolvable:$true] %s143
          %149 = dma.hbm_to_vmem [thread:$0]  %s142, 4096, %s144, %s131, 256, 256, 16
        $region20: #{tpu_custom_call.1} parent=15 // pred_fallthru
          _
        // Predicated region
        $region21: #{tpu_custom_call.1} parent=15 // pred_check
          %p150 = pneg %p74
        $region22: #{tpu_custom_call.1} parent=15 // pred_check_branch
          %152 = sbr.rel (%p150) target = $region24
        $region23: #{tpu_custom_call.1} parent=15 // pred_region
          %p153 = scmp.lt.s32.totalorder %s21, 1
          %s154 = scalar_select %p153, %s21, 1
          %s155 = smul.addr %s154, 16
          %s156 = smul.addr %s155, 8
          %s157 = scalar_lea.vmem %s1, %s156
        $region24: #{tpu_custom_call.1} parent=15 // pred_fallthru
          _
      $region16: #{tpu_custom_call.1} parent=5 // pred_fallthru
        _
      %p158 = scmp.le.s32.totalorder 1, %s14
      %p159 = scmp.lt.s32.totalorder %s14, 3
      %p160 = pnand %p158, %p159
      %p161 = pneg %p160
      // Predicated region
      $region25: #{tpu_custom_call.1} parent=5 // pred_check
        _
      $region26: #{tpu_custom_call.1} parent=5 // pred_check_branch
        %163 = sbr.rel (%p160) target = $region28
      $region27: #{tpu_custom_call.1} parent=5 // pred_region
        %s164 = ssub.s32 %s14, 1
        %s165 = sand.u32 %s41, 1
        %s166 = scalar_lea.sflag [#allocation3], %s165
        %s167 = sand.u32 %s41, 1
        %s168 = smul.addr %s167, 256
        %s169 = scalar_lea.vmem [#allocation2], %s168
        // Predicated region
        $region29: #{tpu_custom_call.1} parent=27 // pred_check
          %p170 = pneg %p54
        $region30: #{tpu_custom_call.1} parent=27 // pred_check_branch
          %172 = sbr.rel (%p170) target = $region32
        $region31: #{tpu_custom_call.1} parent=27 // pred_region
          %173 = dma.done %s166, 4096
        $region32: #{tpu_custom_call.1} parent=27 // pred_fallthru
          _
        %s174 = sand.u32 %s41, 1
        %s175 = scalar_lea.sflag [#allocation3], %s174
        %s176 = sand.u32 %s41, 1
        %s177 = smul.addr %s176, 256
        %s178 = scalar_lea.vmem [#allocation2], %s177
        %p179 = pneg %p54
        %p180 = pneg %p51
        %p181 = scmp.lt.s32.totalorder %s23, 1
        %s182 = scalar_select %p181, %s23, 1
        %s183 = smul.addr %s182, 16
        %s184 = smul.addr %s183, 8
        %s185 = scalar_lea.vmem %s1, %s184
        %p186 = pneg %p80
        %p187 = pneg %p77
        %p188 = pneg %p108
        %p189 = pneg %p105
        %s190 = sand.u32 %s95, 1
        %s191 = scalar_lea.sflag [#allocation4], %s190
        %s192 = sand.u32 %s95, 1
        %s193 = smul.addr %s192, 256
        %s194 = scalar_lea.vmem [#allocation5], %s193
        %s195 = smul.u32 2, %s24
        %p196 = scmp.lt.s32.totalorder %s23, 1
        %s197 = scalar_select %p196, %s23, 1
        %s198 = smul.addr %s197, 16
        %s199 = smul.addr %s198, 8
        %s200 = scalar_lea.vmem %s1, %s199
        %s201 = smul.u32 2, %s24
        %v202 = vld [vmem:[%s169] sm:$0xff]
        %v203 = vld [vmem:[%s169 + $0x8] sm:$0xff]
        %v204 = vld [vmem:[%s169 + $0x10] sm:$0xff]
        %v205 = vld [vmem:[%s169 + $0x18] sm:$0xff]
        %v206 = vld [vmem:[%s169 + $0x20] sm:$0xff]
        %v207 = vld [vmem:[%s169 + $0x28] sm:$0xff]
        %v208 = vld [vmem:[%s169 + $0x30] sm:$0xff]
        %v209 = vld [vmem:[%s169 + $0x38] sm:$0xff]
        %v210 = vld [vmem:[%s169 + $0x40] sm:$0xff]
        %v211 = vld [vmem:[%s169 + $0x48] sm:$0xff]
        %v212 = vld [vmem:[%s169 + $0x50] sm:$0xff]
        %v213 = vld [vmem:[%s169 + $0x58] sm:$0xff]
        %v214 = vld [vmem:[%s169 + $0x60] sm:$0xff]
        %v215 = vld [vmem:[%s169 + $0x68] sm:$0xff]
        %v216 = vld [vmem:[%s169 + $0x70] sm:$0xff]
        %v217 = vld [vmem:[%s169 + $0x78] sm:$0xff]
        %v218 = vld [vmem:[%s169 + $0x80] sm:$0xff]
        %v219 = vld [vmem:[%s169 + $0x88] sm:$0xff]
        %v220 = vld [vmem:[%s169 + $0x90] sm:$0xff]
        %v221 = vld [vmem:[%s169 + $0x98] sm:$0xff]
        %v222 = vld [vmem:[%s169 + $0xa0] sm:$0xff]
        %v223 = vld [vmem:[%s169 + $0xa8] sm:$0xff]
        %v224 = vld [vmem:[%s169 + $0xb0] sm:$0xff]
        %v225 = vld [vmem:[%s169 + $0xb8] sm:$0xff]
        %v226 = vld [vmem:[%s169 + $0xc0] sm:$0xff]
        %v227 = vld [vmem:[%s169 + $0xc8] sm:$0xff]
        %v228 = vld [vmem:[%s169 + $0xd0] sm:$0xff]
        %v229 = vld [vmem:[%s169 + $0xd8] sm:$0xff]
        %v230 = vld [vmem:[%s169 + $0xe0] sm:$0xff]
        %v231 = vld [vmem:[%s169 + $0xe8] sm:$0xff]
        %v232 = vld [vmem:[%s169 + $0xf0] sm:$0xff]
        %v233 = vld [vmem:[%s169 + $0xf8] sm:$0xff]
        %v234 = vld [vmem:[%s200] sm:$0xff]
        %v235 = vld [vmem:[%s200 + $0x8] sm:$0xff]
        %v236 = vld [vmem:[%s200 + $0x10] sm:$0xff]
        %v237 = vld [vmem:[%s200 + $0x18] sm:$0xff]
        %v238 = vld [vmem:[%s200 + $0x20] sm:$0xff]
        %v239 = vld [vmem:[%s200 + $0x28] sm:$0xff]
        %v240 = vld [vmem:[%s200 + $0x30] sm:$0xff]
        %v241 = vld [vmem:[%s200 + $0x38] sm:$0xff]
        %v242 = vld [vmem:[%s200 + $0x40] sm:$0xff]
        %v243 = vld [vmem:[%s200 + $0x48] sm:$0xff]
        %v244 = vld [vmem:[%s200 + $0x50] sm:$0xff]
        %v245 = vld [vmem:[%s200 + $0x58] sm:$0xff]
        %v246 = vld [vmem:[%s200 + $0x60] sm:$0xff]
        %v247 = vld [vmem:[%s200 + $0x68] sm:$0xff]
        %v248 = vld [vmem:[%s200 + $0x70] sm:$0xff]
        %v249 = vld [vmem:[%s200 + $0x78] sm:$0xff]
        %v250 = vadd.f32 %v202, %v204
        %v251 = vadd.f32 %v250, %v206
        %v252 = vadd.f32 %v251, %v208
        %v253 = vadd.f32 %v252, %v210
        %v254 = vadd.f32 %v253, %v212
        %v255 = vadd.f32 %v254, %v214
        %v256 = vadd.f32 %v255, %v216
        %v257 = vadd.f32 %v256, %v218
        %v258 = vadd.f32 %v257, %v220
        %v259 = vadd.f32 %v258, %v222
        %v260 = vadd.f32 %v259, %v224
        %v261 = vadd.f32 %v260, %v226
        %v262 = vadd.f32 %v261, %v228
        %v263 = vadd.f32 %v262, %v230
        %v264 = vadd.f32 %v263, %v232
        %v265 = vrot.slane %v264, 4
        %v266 = vadd.f32 %v264, %v265
        %v267 = vrot.slane %v266, 2
        %v268 = vadd.f32 %v266, %v267
        %v269 = vrot.slane %v268, 1
        %v270 = vadd.f32 %v268, %v269
        %v271 = vadd.f32 %v203, %v205
        %v272 = vadd.f32 %v271, %v207
        %v273 = vadd.f32 %v272, %v209
        %v274 = vadd.f32 %v273, %v211
        %v275 = vadd.f32 %v274, %v213
        %v276 = vadd.f32 %v275, %v215
        %v277 = vadd.f32 %v276, %v217
        %v278 = vadd.f32 %v277, %v219
        %v279 = vadd.f32 %v278, %v221
        %v280 = vadd.f32 %v279, %v223
        %v281 = vadd.f32 %v280, %v225
        %v282 = vadd.f32 %v281, %v227
        %v283 = vadd.f32 %v282, %v229
        %v284 = vadd.f32 %v283, %v231
        %v285 = vadd.f32 %v284, %v233
        %v286 = vrot.slane %v285, 4
        %v287 = vadd.f32 %v285, %v286
        %v288 = vrot.slane %v287, 2
        %v289 = vadd.f32 %v287, %v288
        %v290 = vrot.slane %v289, 1
        %v291 = vadd.f32 %v289, %v290
        %v292 = vrcp.pop 128.0
        %v293 = vmul.f32 %v270, %v292
        %v294 = vmul.f32 %v291, %v292
        %v295 = vsub.f32 %v202, %v293
        %v296 = vsub.f32 %v203, %v294
        %v297 = vsub.f32 %v204, %v293
        %v298 = vsub.f32 %v205, %v294
        %v299 = vsub.f32 %v206, %v293
        %v300 = vsub.f32 %v207, %v294
        %v301 = vsub.f32 %v208, %v293
        %v302 = vsub.f32 %v209, %v294
        %v303 = vsub.f32 %v210, %v293
        %v304 = vsub.f32 %v211, %v294
        %v305 = vsub.f32 %v212, %v293
        %v306 = vsub.f32 %v213, %v294
        %v307 = vsub.f32 %v214, %v293
        %v308 = vsub.f32 %v215, %v294
        %v309 = vsub.f32 %v216, %v293
        %v310 = vsub.f32 %v217, %v294
        %v311 = vsub.f32 %v218, %v293
        %v312 = vsub.f32 %v219, %v294
        %v313 = vsub.f32 %v220, %v293
        %v314 = vsub.f32 %v221, %v294
        %v315 = vsub.f32 %v222, %v293
        %v316 = vsub.f32 %v223, %v294
        %v317 = vsub.f32 %v224, %v293
        %v318 = vsub.f32 %v225, %v294
        %v319 = vsub.f32 %v226, %v293
        %v320 = vsub.f32 %v227, %v294
        %v321 = vsub.f32 %v228, %v293
        %v322 = vsub.f32 %v229, %v294
        %v323 = vsub.f32 %v230, %v293
        %v324 = vsub.f32 %v231, %v294
        %v325 = vsub.f32 %v232, %v293
        %v326 = vsub.f32 %v233, %v294
        %v327 = vmul.f32 %v295, %v295
        %v328 = vmul.f32 %v296, %v296
        %v329 = vmul.f32 %v297, %v297
        %v330 = vmul.f32 %v298, %v298
        %v331 = vmul.f32 %v299, %v299
        %v332 = vmul.f32 %v300, %v300
        %v333 = vmul.f32 %v301, %v301
        %v334 = vmul.f32 %v302, %v302
        %v335 = vmul.f32 %v303, %v303
        %v336 = vmul.f32 %v304, %v304
        %v337 = vmul.f32 %v305, %v305
        %v338 = vmul.f32 %v306, %v306
        %v339 = vmul.f32 %v307, %v307
        %v340 = vmul.f32 %v308, %v308
        %v341 = vmul.f32 %v309, %v309
        %v342 = vmul.f32 %v310, %v310
        %v343 = vmul.f32 %v311, %v311
        %v344 = vmul.f32 %v312, %v312
        %v345 = vmul.f32 %v313, %v313
        %v346 = vmul.f32 %v314, %v314
        %v347 = vmul.f32 %v315, %v315
        %v348 = vmul.f32 %v316, %v316
        %v349 = vmul.f32 %v317, %v317
        %v350 = vmul.f32 %v318, %v318
        %v351 = vmul.f32 %v319, %v319
        %v352 = vmul.f32 %v320, %v320
        %v353 = vmul.f32 %v321, %v321
        %v354 = vmul.f32 %v322, %v322
        %v355 = vmul.f32 %v323, %v323
        %v356 = vmul.f32 %v324, %v324
        %v357 = vmul.f32 %v325, %v325
        %v358 = vmul.f32 %v326, %v326
        %v359 = vadd.f32 %v327, %v329
        %v360 = vadd.f32 %v359, %v331
        %v361 = vadd.f32 %v360, %v333
        %v362 = vadd.f32 %v361, %v335
        %v363 = vadd.f32 %v362, %v337
        %v364 = vadd.f32 %v363, %v339
        %v365 = vadd.f32 %v364, %v341
        %v366 = vadd.f32 %v365, %v343
        %v367 = vadd.f32 %v366, %v345
        %v368 = vadd.f32 %v367, %v347
        %v369 = vadd.f32 %v368, %v349
        %v370 = vadd.f32 %v369, %v351
        %v371 = vadd.f32 %v370, %v353
        %v372 = vadd.f32 %v371, %v355
        %v373 = vadd.f32 %v372, %v357
        %v374 = vrot.slane %v373, 4
        %v375 = vadd.f32 %v373, %v374
        %v376 = vrot.slane %v375, 2
        %v377 = vadd.f32 %v375, %v376
        %v378 = vrot.slane %v377, 1
        %v379 = vadd.f32 %v377, %v378
        %v380 = vadd.f32 %v328, %v330
        %v381 = vadd.f32 %v380, %v332
        %v382 = vadd.f32 %v381, %v334
        %v383 = vadd.f32 %v382, %v336
        %v384 = vadd.f32 %v383, %v338
        %v385 = vadd.f32 %v384, %v340
        %v386 = vadd.f32 %v385, %v342
        %v387 = vadd.f32 %v386, %v344
        %v388 = vadd.f32 %v387, %v346
        %v389 = vadd.f32 %v388, %v348
        %v390 = vadd.f32 %v389, %v350
        %v391 = vadd.f32 %v390, %v352
        %v392 = vadd.f32 %v391, %v354
        %v393 = vadd.f32 %v392, %v356
        %v394 = vadd.f32 %v393, %v358
        %v395 = vrot.slane %v394, 4
        %v396 = vadd.f32 %v394, %v395
        %v397 = vrot.slane %v396, 2
        %v398 = vadd.f32 %v396, %v397
        %v399 = vrot.slane %v398, 1
        %v400 = vadd.f32 %v398, %v399
        %v401 = vmul.f32 %v379, %v292
        %v402 = vmul.f32 %v400, %v292
        %v403 = vadd.f32 %v401, 1e-06
        %v404 = vadd.f32 %v402, 1e-06
        %v405 = vrsqrt.pop %v403
        %v406 = vrsqrt.pop %v404
        %v407 = vmul.f32 %v295, %v405
        %v408 = vmul.f32 %v296, %v406
        %v409 = vmul.f32 %v297, %v405
        %v410 = vmul.f32 %v298, %v406
        %v411 = vmul.f32 %v299, %v405
        %v412 = vmul.f32 %v300, %v406
        %v413 = vmul.f32 %v301, %v405
        %v414 = vmul.f32 %v302, %v406
        %v415 = vmul.f32 %v303, %v405
        %v416 = vmul.f32 %v304, %v406
        %v417 = vmul.f32 %v305, %v405
        %v418 = vmul.f32 %v306, %v406
        %v419 = vmul.f32 %v307, %v405
        %v420 = vmul.f32 %v308, %v406
        %v421 = vmul.f32 %v309, %v405
        %v422 = vmul.f32 %v310, %v406
        %v423 = vmul.f32 %v311, %v405
        %v424 = vmul.f32 %v312, %v406
        %v425 = vmul.f32 %v313, %v405
        %v426 = vmul.f32 %v314, %v406
        %v427 = vmul.f32 %v315, %v405
        %v428 = vmul.f32 %v316, %v406
        %v429 = vmul.f32 %v317, %v405
        %v430 = vmul.f32 %v318, %v406
        %v431 = vmul.f32 %v319, %v405
        %v432 = vmul.f32 %v320, %v406
        %v433 = vmul.f32 %v321, %v405
        %v434 = vmul.f32 %v322, %v406
        %v435 = vmul.f32 %v323, %v405
        %v436 = vmul.f32 %v324, %v406
        %v437 = vmul.f32 %v325, %v405
        %v438 = vmul.f32 %v326, %v406
        %440 = vset.pattern.permute.xlu0 0
        %441 = vperm.xlu0 %440, %v234
        %v442 = vpop.permute.xlu0 %441
        %445 = vset.pattern.permute.xlu0 0
        %446 = vperm.xlu0 %445, %v235
        %v447 = vpop.permute.xlu0 %446
        %450 = vset.pattern.permute.xlu0 0
        %451 = vperm.xlu0 %450, %v236
        %v452 = vpop.permute.xlu0 %451
        %455 = vset.pattern.permute.xlu0 0
        %456 = vperm.xlu0 %455, %v237
        %v457 = vpop.permute.xlu0 %456
        %460 = vset.pattern.permute.xlu0 0
        %461 = vperm.xlu0 %460, %v238
        %v462 = vpop.permute.xlu0 %461
        %465 = vset.pattern.permute.xlu0 0
        %466 = vperm.xlu0 %465, %v239
        %v467 = vpop.permute.xlu0 %466
        %470 = vset.pattern.permute.xlu0 0
        %471 = vperm.xlu0 %470, %v240
        %v472 = vpop.permute.xlu0 %471
        %475 = vset.pattern.permute.xlu0 0
        %476 = vperm.xlu0 %475, %v241
        %v477 = vpop.permute.xlu0 %476
        %480 = vset.pattern.permute.xlu0 0
        %481 = vperm.xlu0 %480, %v242
        %v482 = vpop.permute.xlu0 %481
        %485 = vset.pattern.permute.xlu0 0
        %486 = vperm.xlu0 %485, %v243
        %v487 = vpop.permute.xlu0 %486
        %490 = vset.pattern.permute.xlu0 0
        %491 = vperm.xlu0 %490, %v244
        %v492 = vpop.permute.xlu0 %491
        %495 = vset.pattern.permute.xlu0 0
        %496 = vperm.xlu0 %495, %v245
        %v497 = vpop.permute.xlu0 %496
        %500 = vset.pattern.permute.xlu0 0
        %501 = vperm.xlu0 %500, %v246
        %v502 = vpop.permute.xlu0 %501
        %505 = vset.pattern.permute.xlu0 0
        %506 = vperm.xlu0 %505, %v247
        %v507 = vpop.permute.xlu0 %506
        %510 = vset.pattern.permute.xlu0 0
        %511 = vperm.xlu0 %510, %v248
        %v512 = vpop.permute.xlu0 %511
        %515 = vset.pattern.permute.xlu0 0
        %516 = vperm.xlu0 %515, %v249
        %v517 = vpop.permute.xlu0 %516
        %v519 = vmul.f32 %v407, %v442
        %v520 = vmul.f32 %v408, %v442
        %v521 = vmul.f32 %v409, %v447
        %v522 = vmul.f32 %v410, %v447
        %v523 = vmul.f32 %v411, %v452
        %v524 = vmul.f32 %v412, %v452
        %v525 = vmul.f32 %v413, %v457
        %v526 = vmul.f32 %v414, %v457
        %v527 = vmul.f32 %v415, %v462
        %v528 = vmul.f32 %v416, %v462
        %v529 = vmul.f32 %v417, %v467
        %v530 = vmul.f32 %v418, %v467
        %v531 = vmul.f32 %v419, %v472
        %v532 = vmul.f32 %v420, %v472
        %v533 = vmul.f32 %v421, %v477
        %v534 = vmul.f32 %v422, %v477
        %v535 = vmul.f32 %v423, %v482
        %v536 = vmul.f32 %v424, %v482
        %v537 = vmul.f32 %v425, %v487
        %v538 = vmul.f32 %v426, %v487
        %v539 = vmul.f32 %v427, %v492
        %v540 = vmul.f32 %v428, %v492
        %v541 = vmul.f32 %v429, %v497
        %v542 = vmul.f32 %v430, %v497
        %v543 = vmul.f32 %v431, %v502
        %v544 = vmul.f32 %v432, %v502
        %v545 = vmul.f32 %v433, %v507
        %v546 = vmul.f32 %v434, %v507
        %v547 = vmul.f32 %v435, %v512
        %v548 = vmul.f32 %v436, %v512
        %v549 = vmul.f32 %v437, %v517
        %v550 = vmul.f32 %v438, %v517
        %551 = vset.pattern.permute.xlu0 1
        %552 = vperm.xlu0 %551, %v234
        %v553 = vpop.permute.xlu0 %552
        %555 = vset.pattern.permute.xlu0 1
        %556 = vperm.xlu0 %555, %v235
        %v557 = vpop.permute.xlu0 %556
        %559 = vset.pattern.permute.xlu0 1
        %560 = vperm.xlu0 %559, %v236
        %v561 = vpop.permute.xlu0 %560
        %563 = vset.pattern.permute.xlu0 1
        %564 = vperm.xlu0 %563, %v237
        %v565 = vpop.permute.xlu0 %564
        %567 = vset.pattern.permute.xlu0 1
        %568 = vperm.xlu0 %567, %v238
        %v569 = vpop.permute.xlu0 %568
        %571 = vset.pattern.permute.xlu0 1
        %572 = vperm.xlu0 %571, %v239
        %v573 = vpop.permute.xlu0 %572
        %575 = vset.pattern.permute.xlu0 1
        %576 = vperm.xlu0 %575, %v240
        %v577 = vpop.permute.xlu0 %576
        %579 = vset.pattern.permute.xlu0 1
        %580 = vperm.xlu0 %579, %v241
        %v581 = vpop.permute.xlu0 %580
        %583 = vset.pattern.permute.xlu0 1
        %584 = vperm.xlu0 %583, %v242
        %v585 = vpop.permute.xlu0 %584
        %587 = vset.pattern.permute.xlu0 1
        %588 = vperm.xlu0 %587, %v243
        %v589 = vpop.permute.xlu0 %588
        %591 = vset.pattern.permute.xlu0 1
        %592 = vperm.xlu0 %591, %v244
        %v593 = vpop.permute.xlu0 %592
        %595 = vset.pattern.permute.xlu0 1
        %596 = vperm.xlu0 %595, %v245
        %v597 = vpop.permute.xlu0 %596
        %599 = vset.pattern.permute.xlu0 1
        %600 = vperm.xlu0 %599, %v246
        %v601 = vpop.permute.xlu0 %600
        %603 = vset.pattern.permute.xlu0 1
        %604 = vperm.xlu0 %603, %v247
        %v605 = vpop.permute.xlu0 %604
        %607 = vset.pattern.permute.xlu0 1
        %608 = vperm.xlu0 %607, %v248
        %v609 = vpop.permute.xlu0 %608
        %611 = vset.pattern.permute.xlu0 1
        %612 = vperm.xlu0 %611, %v249
        %v613 = vpop.permute.xlu0 %612
        %v615 = vadd.f32 %v519, %v553
        %v616 = vadd.f32 %v520, %v553
        %v617 = vadd.f32 %v521, %v557
        %v618 = vadd.f32 %v522, %v557
        %v619 = vadd.f32 %v523, %v561
        %v620 = vadd.f32 %v524, %v561
        %v621 = vadd.f32 %v525, %v565
        %v622 = vadd.f32 %v526, %v565
        %v623 = vadd.f32 %v527, %v569
        %v624 = vadd.f32 %v528, %v569
        %v625 = vadd.f32 %v529, %v573
        %v626 = vadd.f32 %v530, %v573
        %v627 = vadd.f32 %v531, %v577
        %v628 = vadd.f32 %v532, %v577
        %v629 = vadd.f32 %v533, %v581
        %v630 = vadd.f32 %v534, %v581
        %v631 = vadd.f32 %v535, %v585
        %v632 = vadd.f32 %v536, %v585
        %v633 = vadd.f32 %v537, %v589
        %v634 = vadd.f32 %v538, %v589
        %v635 = vadd.f32 %v539, %v593
        %v636 = vadd.f32 %v540, %v593
        %v637 = vadd.f32 %v541, %v597
        %v638 = vadd.f32 %v542, %v597
        %v639 = vadd.f32 %v543, %v601
        %v640 = vadd.f32 %v544, %v601
        %v641 = vadd.f32 %v545, %v605
        %v642 = vadd.f32 %v546, %v605
        %v643 = vadd.f32 %v547, %v609
        %v644 = vadd.f32 %v548, %v609
        %v645 = vadd.f32 %v549, %v613
        %v646 = vadd.f32 %v550, %v613
        %647 = vst [vmem:[%s194] sm:$0xff] %v615
        %648 = vst [vmem:[%s194 + $0x8] sm:$0xff] %v616
        %649 = vst [vmem:[%s194 + $0x10] sm:$0xff] %v617
        %650 = vst [vmem:[%s194 + $0x18] sm:$0xff] %v618
        %651 = vst [vmem:[%s194 + $0x20] sm:$0xff] %v619
        %652 = vst [vmem:[%s194 + $0x28] sm:$0xff] %v620
        %653 = vst [vmem:[%s194 + $0x30] sm:$0xff] %v621
        %654 = vst [vmem:[%s194 + $0x38] sm:$0xff] %v622
        %655 = vst [vmem:[%s194 + $0x40] sm:$0xff] %v623
        %656 = vst [vmem:[%s194 + $0x48] sm:$0xff] %v624
        %657 = vst [vmem:[%s194 + $0x50] sm:$0xff] %v625
        %658 = vst [vmem:[%s194 + $0x58] sm:$0xff] %v626
        %659 = vst [vmem:[%s194 + $0x60] sm:$0xff] %v627
        %660 = vst [vmem:[%s194 + $0x68] sm:$0xff] %v628
        %661 = vst [vmem:[%s194 + $0x70] sm:$0xff] %v629
        %662 = vst [vmem:[%s194 + $0x78] sm:$0xff] %v630
        %663 = vst [vmem:[%s194 + $0x80] sm:$0xff] %v631
        %664 = vst [vmem:[%s194 + $0x88] sm:$0xff] %v632
        %665 = vst [vmem:[%s194 + $0x90] sm:$0xff] %v633
        %666 = vst [vmem:[%s194 + $0x98] sm:$0xff] %v634
        %667 = vst [vmem:[%s194 + $0xa0] sm:$0xff] %v635
        %668 = vst [vmem:[%s194 + $0xa8] sm:$0xff] %v636
        %669 = vst [vmem:[%s194 + $0xb0] sm:$0xff] %v637
        %670 = vst [vmem:[%s194 + $0xb8] sm:$0xff] %v638
        %671 = vst [vmem:[%s194 + $0xc0] sm:$0xff] %v639
        %672 = vst [vmem:[%s194 + $0xc8] sm:$0xff] %v640
        %673 = vst [vmem:[%s194 + $0xd0] sm:$0xff] %v641
        %674 = vst [vmem:[%s194 + $0xd8] sm:$0xff] %v642
        %675 = vst [vmem:[%s194 + $0xe0] sm:$0xff] %v643
        %676 = vst [vmem:[%s194 + $0xe8] sm:$0xff] %v644
        %677 = vst [vmem:[%s194 + $0xf0] sm:$0xff] %v645
        %678 = vst [vmem:[%s194 + $0xf8] sm:$0xff] %v646
        %s679 = sand.u32 %s95, 1
        %s680 = scalar_lea.sflag [#allocation4], %s679
        %s681 = sand.u32 %s95, 1
        %s682 = smul.addr %s681, 256
        %s683 = scalar_lea.vmem [#allocation5], %s682
        // Predicated region
        $region33: #{tpu_custom_call.1} parent=27 // pred_check
          %p684 = pneg %p105
        $region34: #{tpu_custom_call.1} parent=27 // pred_check_branch
          %686 = sbr.rel (%p684) target = $region36
        $region35: #{tpu_custom_call.1} parent=27 // pred_region
          %s687 = smul.u32 2, %s24
          %s689 = ssub.s32 4096, 4096
          %690 = vsyncadd %s680, %s689
          %s691 = smul.addr %s23, 32
          %s692 = sadd.s32 %s687, %s691
          %s693 = smul.addr %s692, 128
          %s694 = scalar_lea.hbm %s2, %s693
          %s695 = sshll.u32 %s683, 4
          %s696 = int_to_ptr.vmem [resolvable:$true] %s695
          %701 = dma.vmem_to_hbm [thread:$0]  %s696, 4096, %s694, %s680, 256, 256, 16
        $region36: #{tpu_custom_call.1} parent=27 // pred_fallthru
          _
      $region28: #{tpu_custom_call.1} parent=5 // pred_fallthru
        _
      %p702 = scmp.le.s32.totalorder 2, %s14
      // Predicated region
      $region37: #{tpu_custom_call.1} parent=5 // pred_check
        %p703 = pneg %p702
      $region38: #{tpu_custom_call.1} parent=5 // pred_check_branch
        %705 = sbr.rel (%p703) target = $region40
      $region39: #{tpu_custom_call.1} parent=5 // pred_region
        %s706 = ssub.s32 %s14, 2
        // Predicated region
        $region41: #{tpu_custom_call.1} parent=39 // pred_check
          %p707 = pneg %p111
        $region42: #{tpu_custom_call.1} parent=39 // pred_check_branch
          %709 = sbr.rel (%p707) target = $region44
        $region43: #{tpu_custom_call.1} parent=39 // pred_region
          %s710 = sand.u32 %s96, 1
          %s711 = scalar_lea.sflag [#allocation4], %s710
          %s712 = sand.u32 %s96, 1
          %s713 = smul.addr %s712, 256
          %s714 = scalar_lea.vmem [#allocation5], %s713
          %715 = dma.done %s711, 4096
        $region44: #{tpu_custom_call.1} parent=39 // pred_fallthru
          _
      $region40: #{tpu_custom_call.1} parent=5 // pred_fallthru
        _
    $region6: #{tpu_custom_call.1} parent=1 // loop_footer
      %s18 = sadd.s32 1, %s14
    $region7: #{tpu_custom_call.1} parent=1 // loop_footer_branch
      %13 = sbr.rel target = $region3
    $region8: #{tpu_custom_call.1} parent=1 // loop_exit
      _
    %716 = vsyncpa [#allocation3], 1
    %s717 = scalar_lea.sflag [#allocation3], 1
    %718 = vsyncpa %s717, 1
    %719 = vsyncpa [#allocation4], 1
    %s720 = scalar_lea.sflag [#allocation4], 1
    %721 = vsyncpa %s720, 1

</llo_original>
